<compile_context>
chip_gen: v5e
topology: v5e:2x2
jax: 0.10.0
libtpu: 0.0.40
codegen_flags: <defaults>
</compile_context>

<pallas_src>
import functools

import jax
import jax.numpy as jnp
from jax.experimental import pallas as pl
from jax.experimental.pallas import tpu as pltpu


def _round_up(x, m):
    return -(-x // m) * m


def _graph_readout_kernel(x_ref, counts_ref, w_ref, b_ref, wg_ref,
                          out_ref, acc_ref, gsum_ref, *, fuse_gate):
    # x_ref:      [bt, nt, D]  bf16 node-feature tile (bt graphs, nt-node chunk)
    # counts_ref: [bt, 1]      f32 true node counts (>= 1)
    # w_ref:      [D, Gp]      bf16 fused weights (proj cols [0,G); gate in col Gp-1 if fused)
    # b_ref:      [1, Gp]      f32 fused bias (proj bias cols [0,G); gate bias in col Gp-1 if fused)
    # wg_ref:     [2, D]       f32 gate params for the VPU path (row0=w_gate, row1[0]=b_gate)
    # out_ref:    [bt, Gp]     f32 lane-dense output slab
    # acc_ref:    [bt, Gp]     f32 accumulator (sum over nodes of gate * proj, no proj bias)
    # gsum_ref:   [bt, 1]      f32 accumulator (sum over nodes of gate)
    k = pl.program_id(1)
    num_k = pl.num_programs(1)

    @pl.when(k == 0)
    def _():
        acc_ref[...] = jnp.zeros_like(acc_ref)
        gsum_ref[...] = jnp.zeros_like(gsum_ref)

    bt, nt, d = x_ref.shape
    gp = w_ref.shape[1]

    x = x_ref[...]                                                  # bf16 [bt, nt, d]
    # One MXU matmul over all bt*nt rows of the tile (nt is a multiple of 16 -> free reshape).
    y = jnp.dot(x.reshape(bt * nt, d), w_ref[...],
                preferred_element_type=jnp.float32).reshape(bt, nt, gp)

    counts = counts_ref[...]                                        # [bt, 1] f32 (>= 1)

    if fuse_gate:
        # Gate logit came out of the fused matmul's last column; add only the gate bias.
        gate_logit = y[:, :, gp - 1:gp] + b_ref[0:1, gp - 1:gp][None]     # [bt, nt, 1]
    else:
        # G is already lane-aligned: compute the gate logit on the VPU/XLU instead of
        # paying for 128 dead MXU output columns.
        wg = wg_ref[0:1, :]                                         # [1, d] f32
        bg = wg_ref[1:2, 0:1]                                       # [1, 1] f32
        gate_logit = jnp.sum(x.astype(jnp.float32) * wg[None], axis=-1,
                             keepdims=True) + bg[None]              # [bt, nt, 1]

    gate = jax.nn.sigmoid(gate_logit)                               # [bt, nt, 1] f32

    # Mask padded nodes on the narrow gate column only (global node index = k*nt + local).
    local = jax.lax.broadcasted_iota(jnp.int32, (bt, nt, 1), 1)
    node_idx = (local + k * nt).astype(jnp.float32)
    gate = jnp.where(node_idx < counts.reshape(bt, 1, 1), gate, 0.0)

    acc_ref[...] += jnp.sum(gate * y, axis=1)                       # [bt, gp]
    gsum_ref[...] += jnp.sum(gate, axis=1)                          # [bt, 1]

    @pl.when(k == num_k - 1)
    def _():
        # Fold the projection bias in once per graph: sum(gate*(proj+b)) = acc + b*sum(gate).
        inv_counts = pl.reciprocal(counts, approx=False)            # [bt, 1]
        totals = acc_ref[...] + b_ref[...] * gsum_ref[...]          # [bt, gp]
        out_ref[...] = (totals * inv_counts).astype(out_ref.dtype)


def _choose_tiles(B, N16, D, Gp, rows_target, vmem_budget):
    """Pick (bt graphs, nt nodes) per grid step under a rough VMEM budget."""
    d_lanes = _round_up(max(D, 1), 128)

    def vmem_est(bt, nt):
        bt8 = _round_up(bt, 8)
        x_tile = 2 * bt * _round_up(nt, 16) * d_lanes * 2           # bf16 x, double-buffered
        y_work = bt * nt * Gp * 4 + bt * nt * d_lanes * 4           # f32 intermediates
        w_bufs = 2 * _round_up(D, 16) * Gp * 2 + 2 * 8 * Gp * 4     # weights + bias (dbuf)
        out_b = 2 * bt8 * Gp * 4                                    # out block, double-buffered
        scr = bt8 * Gp * 4 + bt8 * 128 * 4                          # acc + gsum scratch
        misc = 8 * 8 * 128 * 4                                      # counts / wg / slop
        return x_tile + y_work + w_bufs + out_b + scr + misc

    # Node chunk: whole (padded) node axis unless it alone exceeds the row target.
    nt = N16 if N16 <= rows_target else max(16, (rows_target // 16) * 16)
    # Graphs per step: reach the row target, but keep >= 2 batch grid steps when B >= 2
    # so v7x's two TensorCores both get work.
    bt = max(1, rows_target // nt)
    if B >= 2:
        bt = min(bt, -(-B // 2))
    bt = _round_up(bt, 8)               # counts/out blocks need a sublane-aligned batch tile
    # Shrink until the VMEM estimate fits (keeps double-buffering alive on v5e/v7x).
    while bt > 8 and vmem_est(bt, nt) > vmem_budget:
        bt -= 8
    while nt > 16 and vmem_est(bt, nt) > vmem_budget:
        nt = max(16, ((nt // 2) // 16) * 16)
    return bt, nt


def graph_readout(x, counts, w_gate, b_gate, w_proj, b_proj,
                  rows_target=4096, vmem_budget=20 * 1024 * 1024,
                  trim_output=True):
    """Gated mean readout.  x: [B, N, D], counts: [B] -> [B, G] (f32).

    The matmuls run in bf16 on the MXU (f32 accumulation); pass bf16 x to avoid the
    wrapper-side cast.  Padded node rows of x must be finite (they are masked via counts).
    With trim_output=False the lane-dense (B_pad, Gp) slab is returned (no narrow slice).
    """
    B, N, D = x.shape
    G = w_proj.shape[1]

    # Fuse the gate column into the MXU slab only when it is free (G not lane-aligned).
    fuse_gate = (G % 128) != 0
    Gp = _round_up(G + 1, 128) if fuse_gate else _round_up(G, 128)

    N16 = _round_up(N, 16)              # bf16 sublane tile -> free in-kernel reshape
    bt, nt = _choose_tiles(B, N16, D, Gp, rows_target, vmem_budget)
    N_pad = _round_up(N16, nt)
    n_steps_b = max(2 if B >= 2 else 1, -(-B // bt))
    b_pad = n_steps_b * bt

    # Fused weight/bias slab: cols [0, G) = projection; last col = gate (only if fused).
    w_aug = jnp.zeros((D, Gp), jnp.float32).at[:, :G].set(jnp.asarray(w_proj, jnp.float32))
    b_aug = jnp.zeros((1, Gp), jnp.float32).at[:, :G].set(
        jnp.asarray(b_proj, jnp.float32).reshape(1, G))
    if fuse_gate:
        w_aug = w_aug.at[:, Gp - 1].set(jnp.asarray(w_gate, jnp.float32).reshape(D))
        b_aug = b_aug.at[:, Gp - 1].set(jnp.asarray(b_gate, jnp.float32).reshape(-1)[0])
    w_aug = w_aug.astype(jnp.bfloat16)
    # Gate params for the VPU path (unused when fused; tiny resident block).
    wg = jnp.zeros((2, D), jnp.float32)
    wg = wg.at[0].set(jnp.asarray(w_gate, jnp.float32).reshape(D))
    wg = wg.at[1, 0].set(jnp.asarray(b_gate, jnp.float32).reshape(-1)[0])

    # Zero-pad x (finite padding contract) and pad counts with 1 so 1/count is finite.
    x_p = jnp.pad(x.astype(jnp.bfloat16),
                  ((0, b_pad - B), (0, N_pad - N), (0, 0)))
    counts_f = jnp.pad(jnp.asarray(counts, jnp.float32).reshape(B, 1),
                       ((0, b_pad - B), (0, 0)), constant_values=1.0)

    kernel = functools.partial(_graph_readout_kernel, fuse_gate=fuse_gate)

    out = pl.pallas_call(
        kernel,
        out_shape=jax.ShapeDtypeStruct((b_pad, Gp), jnp.float32),
        grid_spec=pltpu.PrefetchScalarGridSpec(
            num_scalar_prefetch=0,
            grid=(b_pad // bt, N_pad // nt),
            in_specs=[
                pl.BlockSpec((bt, nt, D), lambda b, k: (b, k, 0)),   # x tile
                pl.BlockSpec((bt, 1),     lambda b, k: (b, 0)),      # counts tile
                pl.BlockSpec((D, Gp),     lambda b, k: (0, 0)),      # fused weights (resident)
                pl.BlockSpec((1, Gp),     lambda b, k: (0, 0)),      # fused bias (resident)
                pl.BlockSpec((2, D),      lambda b, k: (0, 0)),      # gate params (resident)
            ],
            out_specs=pl.BlockSpec((bt, Gp), lambda b, k: (b, 0)),   # lane-dense store
            scratch_shapes=[
                pltpu.VMEM((bt, Gp), jnp.float32),                   # acc
                pltpu.VMEM((bt, 1), jnp.float32),                    # gate sum
            ],
        ),
        compiler_params=pltpu.CompilerParams(
            dimension_semantics=("parallel", "arbitrary"),
            vmem_limit_bytes=40 * 1024 * 1024,   # raise v5e's 16 MiB / v6e-v7x's 32 MiB default
        ),
    )(x_p, counts_f, w_aug, b_aug, wg)

    if trim_output:
        return out[:B, :G]
    return out


def _reference(x, counts, w_gate, b_gate, w_proj, b_proj):
    gate = jax.nn.sigmoid(jnp.einsum("bnd,de->bne", x, w_gate) + b_gate)
    proj = jnp.einsum("bnd,dg->bng", x, w_proj) + b_proj
    feats = gate * proj
    n = x.shape[1]
    mask = jnp.arange(n)[None, :, None] < counts[:, None, None]
    summed = jnp.sum(jnp.where(mask, feats, 0.0), axis=1)
    return summed / counts[:, None].astype(jnp.float32)


def _run_case(key, B, N, D, G, counts):
    k_x, k_wg, k_bg, k_wp, k_bp = jax.random.split(key, 5)
    x = jax.random.normal(k_x, (B, N, D), dtype=jnp.float32)
    w_gate = jax.random.uniform(k_wg, (D, 1), jnp.float32, -1.0, 1.0) / jnp.sqrt(D)
    b_gate = jax.random.uniform(k_bg, (1, 1), jnp.float32, -1.0, 1.0) / jnp.sqrt(D)
    w_proj = jax.random.uniform(k_wp, (D, G), jnp.float32, -1.0, 1.0) / jnp.sqrt(D)
    b_proj = jax.random.uniform(k_bp, (1, G), jnp.float32, -1.0, 1.0) / jnp.sqrt(D)

    out = graph_readout(x, counts, w_gate, b_gate, w_proj, b_proj)
    out = jax.block_until_ready(out)

    ref = _reference(x, counts, w_gate, b_gate, w_proj, b_proj)
    assert out.shape == (B, G)
    # bf16 matmul inside the kernel vs f32 reference -> loose-but-meaningful tolerance.
    assert jnp.allclose(out, ref, atol=3e-2, rtol=3e-2)


if __name__ == "__main__":
    key = jax.random.PRNGKey(0)
    k1, k2 = jax.random.split(key)

    # Case 1: module defaults (graph_embed_dim = 2 * node_embed_dim), fused-gate path.
    _run_case(k1, B=2, N=8, D=32, G=64, counts=jnp.array([8, 5], dtype=jnp.int32))

    # Case 2: lane-aligned graph_embed_dim (G % 128 == 0) exercises the VPU-gate path.
    _run_case(k2, B=3, N=12, D=64, G=128, counts=jnp.array([12, 7, 1], dtype=jnp.int32))

    print("KERNEL_OK")
</pallas_src>

<mosaic_0001>
module attributes {stable_mosaic.version = 11 : i64} {
  func.func @_graph_readout_kernel(%arg0: i32, %arg1: i32, %arg2: memref<8x16x32xbf16, #tpu.memory_space<vmem>>, %arg3: memref<8x1xf32, #tpu.memory_space<vmem>>, %arg4: memref<32x128xbf16, #tpu.memory_space<vmem>>, %arg5: memref<1x128xf32, #tpu.memory_space<vmem>>, %arg6: memref<2x32xf32, #tpu.memory_space<vmem>>, %arg7: memref<8x128xf32, #tpu.memory_space<vmem>>, %arg8: memref<8x128xf32, #tpu.memory_space<vmem>>, %arg9: memref<8x1xf32, #tpu.memory_space<vmem>>) attributes {dimension_semantics = [#tpu.dimension_semantics<parallel>, #tpu.dimension_semantics<arbitrary>], iteration_bounds = array<i64: 2, 1>, scalar_prefetch = 0 : i64, scratch_operands = 2 : i64, tpu.core_type = #tpu.core_type<tc>, window_params = [{transform_indices = @transform_0, window_bounds = array<i64: 8, 16, 32>}, {transform_indices = @transform_1, window_bounds = array<i64: 8, 1>}, {pipeline_mode = #tpu.pipeline_mode<synchronous>, transform_indices = @transform_2, window_bounds = array<i64: 32, 128>}, {pipeline_mode = #tpu.pipeline_mode<synchronous>, transform_indices = @transform_3, window_bounds = array<i64: 1, 128>}, {pipeline_mode = #tpu.pipeline_mode<synchronous>, transform_indices = @transform_4, window_bounds = array<i64: 2, 32>}, {transform_indices = @transform_5, window_bounds = array<i64: 8, 128>}]} {
    %c0_i32 = arith.constant 0 : i32
    %0 = arith.cmpi eq, %arg1, %c0_i32 : i32
    %1 = arith.extui %0 : i1 to i32
    %c0_i32_0 = arith.constant 0 : i32
    %2 = arith.cmpi ne, %1, %c0_i32_0 : i32
    scf.if %2 {
      %cst_22 = arith.constant 0.000000e+00 : f32
      %42 = vector.broadcast %cst_22 : f32 to vector<8x128xf32>
      %c0_23 = arith.constant 0 : index
      %c0_24 = arith.constant 0 : index
      %43 = vector.load %arg8[%c0_23, %c0_24] : memref<8x128xf32, #tpu.memory_space<vmem>>, vector<8x128xf32>
      tpu.vector_store %arg8[%c0_23, %c0_24], %42 {strides = array<i32>} : memref<8x128xf32, #tpu.memory_space<vmem>>, vector<8x128xf32>,
      %cst_25 = arith.constant 0.000000e+00 : f32
      %44 = vector.broadcast %cst_25 : f32 to vector<8x1xf32>
      %c0_26 = arith.constant 0 : index
      %c0_27 = arith.constant 0 : index
      %45 = vector.load %arg9[%c0_26, %c0_27] : memref<8x1xf32, #tpu.memory_space<vmem>>, vector<8x1xf32>
      tpu.vector_store %arg9[%c0_26, %c0_27], %44 {strides = array<i32>} : memref<8x1xf32, #tpu.memory_space<vmem>>, vector<8x1xf32>,
    } else {
    }
    %c0 = arith.constant 0 : index
    %c0_1 = arith.constant 0 : index
    %c0_2 = arith.constant 0 : index
    %3 = vector.load %arg2[%c0, %c0_1, %c0_2] : memref<8x16x32xbf16, #tpu.memory_space<vmem>>, vector<8x16x32xbf16>
    %4 = vector.shape_cast %3 : vector<8x16x32xbf16> to vector<128x32xbf16>
    %c0_3 = arith.constant 0 : index
    %c0_4 = arith.constant 0 : index
    %5 = vector.load %arg4[%c0_3, %c0_4] : memref<32x128xbf16, #tpu.memory_space<vmem>>, vector<32x128xbf16>
    %cst = arith.constant dense<0.000000e+00> : vector<128x128xf32>
    %6 = tpu.matmul %4, %5, %cst {dimension_numbers = #tpu.dot_dimension_numbers<[1], [0], [0], [1], [0, 0, 1, 1], [], []>} : vector<128x32xbf16>, vector<32x128xbf16>, vector<128x128xf32> -> vector<128x128xf32>
    %7 = vector.shape_cast %6 : vector<128x128xf32> to vector<8x16x128xf32>
    %c0_5 = arith.constant 0 : index
    %c0_6 = arith.constant 0 : index
    %8 = vector.load %arg3[%c0_5, %c0_6] : memref<8x1xf32, #tpu.memory_space<vmem>>, vector<8x1xf32>
    %9 = vector.extract_strided_slice %7 {offsets = [0, 0, 127], sizes = [8, 16, 1], strides = [1, 1, 1]} : vector<8x16x128xf32> to vector<8x16x1xf32>
    %c0_7 = arith.constant 0 : index
    %c127 = arith.constant 127 : index
    %10 = vector.load %arg5[%c0_7, %c127] : memref<1x128xf32, #tpu.memory_space<vmem>>, vector<1x1xf32>
    %11 = vector.shape_cast %10 : vector<1x1xf32> to vector<1x1x1xf32>
    %12 = vector.broadcast %11 : vector<1x1x1xf32> to vector<8x16x1xf32>
    %13 = arith.addf %9, %12 : vector<8x16x1xf32>
    %14 = arith.negf %13 : vector<8x16x1xf32>
    %15 = math.exp %14 : vector<8x16x1xf32>
    %cst_8 = arith.constant 1.000000e+00 : f32
    %16 = vector.broadcast %cst_8 : f32 to vector<8x16x1xf32>
    %17 = arith.addf %16, %15 : vector<8x16x1xf32>
    %18 = arith.divf %16, %17 : vector<8x16x1xf32>
    %19 = tpu.iota {dimensions = array<i32: 1>} : vector<8x16x1xi32>
    %c16_i32 = arith.constant 16 : i32
    %20 = arith.muli %arg1, %c16_i32 : i32
    %21 = vector.broadcast %20 : i32 to vector<8x16x1xi32>
    %22 = arith.addi %19, %21 : vector<8x16x1xi32>
    %23 = arith.sitofp %22 : vector<8x16x1xi32> to vector<8x16x1xf32>
    %24 = vector.shape_cast %8 : vector<8x1xf32> to vector<8x1x1xf32>
    %25 = vector.broadcast %24 : vector<8x1x1xf32> to vector<8x16x1xf32>
    %26 = arith.cmpf olt, %23, %25 : vector<8x16x1xf32>
    %cst_9 = arith.constant 0.000000e+00 : f32
    %27 = vector.broadcast %cst_9 : f32 to vector<8x16x1xf32>
    %28 = arith.select %26, %18, %27 : vector<8x16x1xi1>, vector<8x16x1xf32>
    %c0_10 = arith.constant 0 : index
    %c0_11 = arith.constant 0 : index
    %29 = vector.load %arg8[%c0_10, %c0_11] : memref<8x128xf32, #tpu.memory_space<vmem>>, vector<8x128xf32>
    %30 = vector.broadcast %28 : vector<8x16x1xf32> to vector<8x16x128xf32>
    %31 = arith.mulf %30, %7 : vector<8x16x128xf32>
    %cst_12 = arith.constant dense<0.000000e+00> : vector<8x128xf32>
    %32 = vector.multi_reduction <add>, %31, %cst_12 [1] : vector<8x16x128xf32> to vector<8x128xf32>
    %33 = arith.addf %29, %32 : vector<8x128xf32>
    %c0_13 = arith.constant 0 : index
    %c0_14 = arith.constant 0 : index
    %34 = vector.load %arg8[%c0_13, %c0_14] : memref<8x128xf32, #tpu.memory_space<vmem>>, vector<8x128xf32>
    tpu.vector_store %arg8[%c0_13, %c0_14], %33 {strides = array<i32>} : memref<8x128xf32, #tpu.memory_space<vmem>>, vector<8x128xf32>,
    %c0_15 = arith.constant 0 : index
    %c0_16 = arith.constant 0 : index
    %35 = vector.load %arg9[%c0_15, %c0_16] : memref<8x1xf32, #tpu.memory_space<vmem>>, vector<8x1xf32>
    %cst_17 = arith.constant dense<0.000000e+00> : vector<8x1xf32>
    %36 = vector.multi_reduction <add>, %28, %cst_17 [1] : vector<8x16x1xf32> to vector<8x1xf32>
    %37 = arith.addf %35, %36 : vector<8x1xf32>
    %c0_18 = arith.constant 0 : index
    %c0_19 = arith.constant 0 : index
    %38 = vector.load %arg9[%c0_18, %c0_19] : memref<8x1xf32, #tpu.memory_space<vmem>>, vector<8x1xf32>
    tpu.vector_store %arg9[%c0_18, %c0_19], %37 {strides = array<i32>} : memref<8x1xf32, #tpu.memory_space<vmem>>, vector<8x1xf32>,
    %c0_i32_20 = arith.constant 0 : i32
    %39 = arith.cmpi eq, %arg1, %c0_i32_20 : i32
    %40 = arith.extui %39 : i1 to i32
    %c0_i32_21 = arith.constant 0 : i32
    %41 = arith.cmpi ne, %40, %c0_i32_21 : i32
    scf.if %41 {
      %42 = tpu.reciprocal %8 : vector<8x1xf32> -> vector<8x1xf32>
      %c0_22 = arith.constant 0 : index
      %c0_23 = arith.constant 0 : index
      %43 = vector.load %arg8[%c0_22, %c0_23] : memref<8x128xf32, #tpu.memory_space<vmem>>, vector<8x128xf32>
      %c0_24 = arith.constant 0 : index
      %c0_25 = arith.constant 0 : index
      %44 = vector.load %arg5[%c0_24, %c0_25] : memref<1x128xf32, #tpu.memory_space<vmem>>, vector<1x128xf32>
      %c0_26 = arith.constant 0 : index
      %c0_27 = arith.constant 0 : index
      %45 = vector.load %arg9[%c0_26, %c0_27] : memref<8x1xf32, #tpu.memory_space<vmem>>, vector<8x1xf32>
      %46 = vector.broadcast %44 : vector<1x128xf32> to vector<8x128xf32>
      %47 = vector.broadcast %45 : vector<8x1xf32> to vector<8x128xf32>
      %48 = arith.mulf %46, %47 : vector<8x128xf32>
      %49 = arith.addf %43, %48 : vector<8x128xf32>
      %50 = vector.broadcast %42 : vector<8x1xf32> to vector<8x128xf32>
      %51 = arith.mulf %49, %50 : vector<8x128xf32>
      %c0_28 = arith.constant 0 : index
      %c0_29 = arith.constant 0 : index
      %52 = vector.load %arg7[%c0_28, %c0_29] : memref<8x128xf32, #tpu.memory_space<vmem>>, vector<8x128xf32>
      tpu.vector_store %arg7[%c0_28, %c0_29], %51 {strides = array<i32>} : memref<8x128xf32, #tpu.memory_space<vmem>>, vector<8x128xf32>,
    } else {
    }
    return
  }
  func.func @transform_0(%arg0: i32, %arg1: i32) -> (i32, i32, i32) {
    %c0_i32 = arith.constant 0 : i32
    %c0_i32_0 = arith.constant 0 : i32
    return %arg0, %arg1, %c0_i32 : i32, i32, i32
  }
  func.func @transform_1(%arg0: i32, %arg1: i32) -> (i32, i32) {
    %c0_i32 = arith.constant 0 : i32
    %c0_i32_0 = arith.constant 0 : i32
    return %arg0, %c0_i32 : i32, i32
  }
  func.func @transform_2(%arg0: i32, %arg1: i32) -> (i32, i32) {
    %c0_i32 = arith.constant 0 : i32
    %c0_i32_0 = arith.constant 0 : i32
    %c0_i32_1 = arith.constant 0 : i32
    return %c0_i32, %c0_i32_0 : i32, i32
  }
  func.func @transform_3(%arg0: i32, %arg1: i32) -> (i32, i32) {
    %c0_i32 = arith.constant 0 : i32
    %c0_i32_0 = arith.constant 0 : i32
    %c0_i32_1 = arith.constant 0 : i32
    return %c0_i32, %c0_i32_0 : i32, i32
  }
  func.func @transform_4(%arg0: i32, %arg1: i32) -> (i32, i32) {
    %c0_i32 = arith.constant 0 : i32
    %c0_i32_0 = arith.constant 0 : i32
    %c0_i32_1 = arith.constant 0 : i32
    return %c0_i32, %c0_i32_0 : i32, i32
  }
  func.func @transform_5(%arg0: i32, %arg1: i32) -> (i32, i32) {
    %c0_i32 = arith.constant 0 : i32
    %c0_i32_0 = arith.constant 0 : i32
    return %arg0, %c0_i32 : i32, i32
  }
}

</mosaic_0001>

<llo_original>
// kernel: tpu_custom_call.1
$region0: #{tpu_custom_call.1}
  #allocation0 [shape = 'u32[]', space=smem, size = 0x4, offset = 0x4, fixed_abs, tag = 'smem constant byte address 0x4 - core index']
  #allocation1 [shape = 'u32[72,128]{1,0:T(1,128)}', space=vmem, size = 0x9000, scoped, tag = 'internal scratch']
  #allocation2 [shape = 'f32[8,128]{1,0:T(8,128)}', space=vmem, size = 0x1000, scoped, tag = 'scratch operand']
  #allocation3 [shape = 'f32[8,1]{1,0:T(8,128)}', space=vmem, size = 0x1000, scoped, tag = 'scratch operand']
  %s0 = inlined_call_operand.hbm [shape: bf16[16,16,32], index: 0, kind: input, shape index: {}]
  %s1 = inlined_call_operand.vmem [shape: f32[16,1], index: 1, kind: input, shape index: {}]
  %s2 = inlined_call_operand.vmem [shape: bf16[32,128], index: 2, kind: input, shape index: {}]
  %s3 = inlined_call_operand.vmem [shape: f32[1,128], index: 3, kind: input, shape index: {}]
  %s4 = inlined_call_operand.vmem [shape: f32[2,32], index: 4, kind: input, shape index: {}]
  %s5 = inlined_call_operand.hbm [shape: f32[16,128], index: 5, kind: output, shape index: {}]
  %s6 = sld [smem:[#allocation0]]
  $region65: #{tpu_custom_call.1} parent=0
    _
  %s8 = ssub.s32 1, %s6
  %s9 = scalar_select 0, %s8, %s6
  $region1: #{tpu_custom_call.1} parent=0
    #allocation4 [shape = 'u8[65536]{0}', space=vmem, size = 0x10000, scoped, tag = 'input window, operand 0']
    #allocation5 [shape = 's32[2]{0}', space=sflag, size = 0x8, scoped, tag = 'scoped memory for tpu_custom_call.1']
    #allocation6 [shape = 's32[2]{0}', space=sflag, size = 0x8, scoped, tag = 'scoped memory for tpu_custom_call.1']
    #allocation7 [shape = 'u8[8192]{0}', space=vmem, size = 0x2000, scoped, tag = 'output window, operand 0']
    %10 = vsyncpa [#allocation5], 0
    %s11 = scalar_lea.sflag [#allocation5], 1
    %12 = vsyncpa %s11, 0
    %13 = vsyncpa [#allocation6], 0
    %s14 = scalar_lea.sflag [#allocation6], 1
    %15 = vsyncpa %s14, 0
    loop: start=0, step=1, limit=4
    $region2: #{tpu_custom_call.1} parent=1 // loop_pre_header
      _
    $region3: #{tpu_custom_call.1} parent=1 // loop_header
      %s17 = sphi 0, %s21
      %p18 = scmp.ge.s32.totalorder %s17, 4
      %s24 = sphi 0, %s36
      %s25 = sphi 0, %s32
      %s26 = sphi 0, %s24
      %s27 = sphi 0, %s25
      %s28 = sphi 0, %s26
      %s29 = sphi 0, %s27
      %s41 = sphi 0, %s43
      %s44 = sphi 0, %s41
      %s45 = sphi 0, %s44
      %s61 = sphi 0, %s45
      %s67 = sphi 0, %s69
      %s70 = sphi 0, %s67
      %s71 = sphi 0, %s70
      %s87 = sphi 0, %s71
      %s91 = sphi 0, %s91
      %s93 = sphi 0, %s91
      %s94 = sphi 0, %s93
      %s108 = sphi 0, %s94
      %s112 = sphi 0, %s112
      %s114 = sphi 0, %s112
      %s115 = sphi 0, %s114
      %s129 = sphi 0, %s115
      %s133 = sphi 0, %s133
      %s135 = sphi 0, %s133
      %s136 = sphi 0, %s135
      %s150 = sphi 0, %s136
      %s156 = sphi 0, %s158
      %s159 = sphi 0, %s156
      %s160 = sphi 0, %s159
      %s176 = sphi 0, %s160
    $region4: #{tpu_custom_call.1} parent=1 // loop_header_branch
      %20 = sbr.rel (%p18) target = $region8
    $region5: #{tpu_custom_call.1} parent=1 // loop_body
      %s22 = ssub.s32 %s17, 1
      %s23 = ssub.s32 %s17, 2
      %s30 = sadd.s32 1, %s25
      %p31 = scmp.ge.s32.totalorder %s30, 1
      %s32 = scalar_select %p31, 0, %s30
      %s33 = sadd.s32 1, %s24
      %s34 = scalar_select %p31, %s33, %s24
      %p35 = scmp.ge.s32.totalorder %s34, 2
      %s36 = scalar_select %p35, 0, %s34
      %s37 = ssub.s32 %s24, %s36
      %s38 = ssub.s32 %s25, %s32
      %s39 = sor.u32 %s37, %s38
      %p40 = scmp.eq.s32.totalorder %s39, 0
      %s42 = sadd.s32 %s41, 1
      %s43 = scalar_select %p40, %s41, %s42
      %p46 = pneg %p40
      %p47 = scmp.eq.s32.totalorder %s17, 1
      %p48 = por %p46, %p47
      %p49 = scmp.ne.s32.totalorder %s41, %s44
      %p50 = scmp.eq.s32.totalorder %s17, 0
      %p51 = por %p49, %p50
      %p52 = scmp.ne.s32.totalorder %s41, %s44
      %p53 = scmp.eq.s32.totalorder %s22, 1
      %p54 = por %p52, %p53
      %p55 = scmp.ne.s32.totalorder %s44, %s45
      %p56 = scmp.eq.s32.totalorder %s22, 0
      %p57 = por %p55, %p56
      %p58 = scmp.ne.s32.totalorder %s44, %s45
      %p59 = scmp.eq.s32.totalorder %s23, 1
      %p60 = por %p58, %p59
      %p62 = scmp.ne.s32.totalorder %s45, %s61
      %p63 = scmp.eq.s32.totalorder %s23, 0
      %p64 = por %p62, %p63
      %s65 = ssub.s32 %s24, %s36
      %p66 = scmp.eq.s32.totalorder %s65, 0
      %s68 = sadd.s32 %s67, 1
      %s69 = scalar_select %p66, %s67, %s68
      %p72 = pneg %p66
      %p73 = scmp.eq.s32.totalorder %s17, 1
      %p74 = por %p72, %p73
      %p75 = scmp.ne.s32.totalorder %s67, %s70
      %p76 = scmp.eq.s32.totalorder %s17, 0
      %p77 = por %p75, %p76
      %p78 = scmp.ne.s32.totalorder %s67, %s70
      %p79 = scmp.eq.s32.totalorder %s22, 1
      %p80 = por %p78, %p79
      %p81 = scmp.ne.s32.totalorder %s70, %s71
      %p82 = scmp.eq.s32.totalorder %s22, 0
      %p83 = por %p81, %p82
      %p84 = scmp.ne.s32.totalorder %s70, %s71
      %p85 = scmp.eq.s32.totalorder %s23, 1
      %p86 = por %p84, %p85
      %p88 = scmp.ne.s32.totalorder %s71, %s87
      %p89 = scmp.eq.s32.totalorder %s23, 0
      %p90 = por %p88, %p89
      %s92 = sadd.s32 %s91, 1
      %p95 = scmp.eq.s32.totalorder %s17, 1
      %p96 = scmp.ne.s32.totalorder %s91, %s93
      %p97 = scmp.eq.s32.totalorder %s17, 0
      %p98 = por %p96, %p97
      %p99 = scmp.ne.s32.totalorder %s91, %s93
      %p100 = scmp.eq.s32.totalorder %s22, 1
      %p101 = por %p99, %p100
      %p102 = scmp.ne.s32.totalorder %s93, %s94
      %p103 = scmp.eq.s32.totalorder %s22, 0
      %p104 = por %p102, %p103
      %p105 = scmp.ne.s32.totalorder %s93, %s94
      %p106 = scmp.eq.s32.totalorder %s23, 1
      %p107 = por %p105, %p106
      %p109 = scmp.ne.s32.totalorder %s94, %s108
      %p110 = scmp.eq.s32.totalorder %s23, 0
      %p111 = por %p109, %p110
      %s113 = sadd.s32 %s112, 1
      %p116 = scmp.eq.s32.totalorder %s17, 1
      %p117 = scmp.ne.s32.totalorder %s112, %s114
      %p118 = scmp.eq.s32.totalorder %s17, 0
      %p119 = por %p117, %p118
      %p120 = scmp.ne.s32.totalorder %s112, %s114
      %p121 = scmp.eq.s32.totalorder %s22, 1
      %p122 = por %p120, %p121
      %p123 = scmp.ne.s32.totalorder %s114, %s115
      %p124 = scmp.eq.s32.totalorder %s22, 0
      %p125 = por %p123, %p124
      %p126 = scmp.ne.s32.totalorder %s114, %s115
      %p127 = scmp.eq.s32.totalorder %s23, 1
      %p128 = por %p126, %p127
      %p130 = scmp.ne.s32.totalorder %s115, %s129
      %p131 = scmp.eq.s32.totalorder %s23, 0
      %p132 = por %p130, %p131
      %s134 = sadd.s32 %s133, 1
      %p137 = scmp.eq.s32.totalorder %s17, 1
      %p138 = scmp.ne.s32.totalorder %s133, %s135
      %p139 = scmp.eq.s32.totalorder %s17, 0
      %p140 = por %p138, %p139
      %p141 = scmp.ne.s32.totalorder %s133, %s135
      %p142 = scmp.eq.s32.totalorder %s22, 1
      %p143 = por %p141, %p142
      %p144 = scmp.ne.s32.totalorder %s135, %s136
      %p145 = scmp.eq.s32.totalorder %s22, 0
      %p146 = por %p144, %p145
      %p147 = scmp.ne.s32.totalorder %s135, %s136
      %p148 = scmp.eq.s32.totalorder %s23, 1
      %p149 = por %p147, %p148
      %p151 = scmp.ne.s32.totalorder %s136, %s150
      %p152 = scmp.eq.s32.totalorder %s23, 0
      %p153 = por %p151, %p152
      %s154 = ssub.s32 %s24, %s36
      %p155 = scmp.eq.s32.totalorder %s154, 0
      %s157 = sadd.s32 %s156, 1
      %s158 = scalar_select %p155, %s156, %s157
      %p161 = pneg %p155
      %p162 = scmp.eq.s32.totalorder %s17, 1
      %p163 = por %p161, %p162
      %p164 = scmp.ne.s32.totalorder %s156, %s159
      %p165 = scmp.eq.s32.totalorder %s17, 0
      %p166 = por %p164, %p165
      %p167 = scmp.ne.s32.totalorder %s156, %s159
      %p168 = scmp.eq.s32.totalorder %s22, 1
      %p169 = por %p167, %p168
      %p170 = scmp.ne.s32.totalorder %s159, %s160
      %p171 = scmp.eq.s32.totalorder %s22, 0
      %p172 = por %p170, %p171
      %p173 = scmp.ne.s32.totalorder %s159, %s160
      %p174 = scmp.eq.s32.totalorder %s23, 1
      %p175 = por %p173, %p174
      %p177 = scmp.ne.s32.totalorder %s160, %s176
      %p178 = scmp.eq.s32.totalorder %s23, 0
      %p179 = por %p177, %p178
      %p180 = scmp.le.s32.totalorder 1, %s17
      %p181 = scmp.lt.s32.totalorder %s17, 3
      %p182 = pnand %p180, %p181
      %p183 = pneg %p182
      // Predicated region
      $region9: #{tpu_custom_call.1} parent=5 // pred_check
        _
      $region10: #{tpu_custom_call.1} parent=5 // pred_check_branch
        %185 = sbr.rel (%p182) target = $region12
      $region11: #{tpu_custom_call.1} parent=5 // pred_region
        %s186 = ssub.s32 %s17, 1
        // Predicated region
        $region13: #{tpu_custom_call.1} parent=11 // pred_check
          %p187 = pneg %p104
        $region14: #{tpu_custom_call.1} parent=11 // pred_check_branch
          %189 = sbr.rel (%p187) target = $region16
        $region15: #{tpu_custom_call.1} parent=11 // pred_region
          _
        $region16: #{tpu_custom_call.1} parent=11 // pred_fallthru
          _
        // Predicated region
        $region17: #{tpu_custom_call.1} parent=11 // pred_check
          %p190 = pneg %p125
        $region18: #{tpu_custom_call.1} parent=11 // pred_check_branch
          %192 = sbr.rel (%p190) target = $region20
        $region19: #{tpu_custom_call.1} parent=11 // pred_region
          _
        $region20: #{tpu_custom_call.1} parent=11 // pred_fallthru
          _
        // Predicated region
        $region21: #{tpu_custom_call.1} parent=11 // pred_check
          %p193 = pneg %p146
        $region22: #{tpu_custom_call.1} parent=11 // pred_check_branch
          %195 = sbr.rel (%p193) target = $region24
        $region23: #{tpu_custom_call.1} parent=11 // pred_region
          _
        $region24: #{tpu_custom_call.1} parent=11 // pred_fallthru
          _
      $region12: #{tpu_custom_call.1} parent=5 // pred_fallthru
        _
      %p196 = scmp.lt.s32.totalorder %s17, 2
      // Predicated region
      $region25: #{tpu_custom_call.1} parent=5 // pred_check
        %p197 = pneg %p196
      $region26: #{tpu_custom_call.1} parent=5 // pred_check_branch
        %199 = sbr.rel (%p197) target = $region28
      $region27: #{tpu_custom_call.1} parent=5 // pred_region
        // Predicated region
        $region29: #{tpu_custom_call.1} parent=27 // pred_check
          %p200 = pneg %p51
        $region30: #{tpu_custom_call.1} parent=27 // pred_check_branch
          %202 = sbr.rel (%p200) target = $region32
        $region31: #{tpu_custom_call.1} parent=27 // pred_region
          %s203 = sand.u32 %s41, 1
          %s204 = scalar_lea.sflag [#allocation5], %s203
          %s205 = sand.u32 %s41, 1
          %s206 = smul.addr %s205, 64
          %s207 = scalar_lea.vmem [#allocation4], %s206
          %s208 = smul.u32 8, %s24
          %s209 = smul.u32 2, %s25
          %211 = vsyncadd %s204, 0
          %s212 = smul.addr %s208, 2
          %s213 = sadd.s32 %s209, %s212
          %s214 = smul.addr %s213, 4
          %s215 = scalar_lea.hbm %s0, %s214
          %s216 = sshll.u32 %s215, 4
          %s217 = int_to_ptr.hbm [resolvable:$true] %s216
          %s218 = sshll.u32 %s207, 4
          %s219 = int_to_ptr.vmem [resolvable:$true] %s218
          %224 = dma.hbm_to_vmem [thread:$0]  %s217, 1024, %s219, %s204, 64, 64, 4
        $region32: #{tpu_custom_call.1} parent=27 // pred_fallthru
          _
        // Predicated region
        $region33: #{tpu_custom_call.1} parent=27 // pred_check
          %p225 = pneg %p77
        $region34: #{tpu_custom_call.1} parent=27 // pred_check_branch
          %227 = sbr.rel (%p225) target = $region36
        $region35: #{tpu_custom_call.1} parent=27 // pred_region
          %p228 = scmp.lt.s32.totalorder %s24, 1
          %s229 = scalar_select %p228, %s24, 1
          %s230 = smul.addr %s229, 8
          %s231 = scalar_lea.vmem %s1, %s230
        $region36: #{tpu_custom_call.1} parent=27 // pred_fallthru
          _
      $region28: #{tpu_custom_call.1} parent=5 // pred_fallthru
        _
      %p232 = scmp.le.s32.totalorder 1, %s17
      %p233 = scmp.lt.s32.totalorder %s17, 3
      %p234 = pnand %p232, %p233
      %p235 = pneg %p234
      // Predicated region
      $region37: #{tpu_custom_call.1} parent=5 // pred_check
        _
      $region38: #{tpu_custom_call.1} parent=5 // pred_check_branch
        %237 = sbr.rel (%p234) target = $region40
      $region39: #{tpu_custom_call.1} parent=5 // pred_region
        %s238 = ssub.s32 %s17, 1
        %s239 = sand.u32 %s44, 1
        %s240 = scalar_lea.sflag [#allocation5], %s239
        %s241 = sand.u32 %s44, 1
        %s242 = smul.addr %s241, 64
        %s243 = scalar_lea.vmem [#allocation4], %s242
        // Predicated region
        $region41: #{tpu_custom_call.1} parent=39 // pred_check
          %p244 = pneg %p57
        $region42: #{tpu_custom_call.1} parent=39 // pred_check_branch
          %246 = sbr.rel (%p244) target = $region44
        $region43: #{tpu_custom_call.1} parent=39 // pred_region
          %248 = dma.done %s240, 1024
        $region44: #{tpu_custom_call.1} parent=39 // pred_fallthru
          _
        %s249 = sand.u32 %s44, 1
        %s250 = scalar_lea.sflag [#allocation5], %s249
        %s251 = sand.u32 %s44, 1
        %s252 = smul.addr %s251, 64
        %s253 = scalar_lea.vmem [#allocation4], %s252
        %p254 = pneg %p57
        %p255 = pneg %p54
        %p256 = scmp.lt.s32.totalorder %s26, 1
        %s257 = scalar_select %p256, %s26, 1
        %s258 = smul.addr %s257, 8
        %s259 = scalar_lea.vmem %s1, %s258
        %p260 = pneg %p83
        %p261 = pneg %p80
        %p262 = pneg %p104
        %p263 = pneg %p101
        %p264 = pneg %p125
        %p265 = pneg %p122
        %p266 = pneg %p146
        %p267 = pneg %p143
        %p268 = pneg %p172
        %p269 = pneg %p169
        %s270 = sand.u32 %s159, 1
        %s271 = scalar_lea.sflag [#allocation6], %s270
        %s272 = sand.u32 %s159, 1
        %s273 = smul.addr %s272, 8
        %s274 = scalar_lea.vmem [#allocation7], %s273
        %s275 = smul.u32 8, %s26
        %s276 = smul.u32 2, %s27
        %p277 = scmp.lt.s32.totalorder %s26, 1
        %s278 = scalar_select %p277, %s26, 1
        %s279 = smul.addr %s278, 8
        %s280 = scalar_lea.vmem %s1, %s279
        %p282 = scmp.eq.s32.totalorder %s27, 0
        // Predicated region
        $region45: #{tpu_custom_call.1} parent=39 // pred_check
          %p283 = pneg %p282
        $region46: #{tpu_custom_call.1} parent=39 // pred_check_branch
          %285 = sbr.rel (%p283) target = $region48
        $region47: #{tpu_custom_call.1} parent=39 // pred_region
          %286 = vst [vmem:[#allocation2] sm:$0xff] 0.0
          %vm287 = vcmask 7168
          %288 = vst.msk [vmem:[#allocation3] sm:$0xff] %vm287, 0.0
        $region48: #{tpu_custom_call.1} parent=39 // pred_fallthru
          _
        %v289 = vld [vmem:[%s243] sm:$0xf]
        %v290 = vld [vmem:[%s243 + $0x4] sm:$0xf]
        %v291 = vld [vmem:[%s243 + $0x8] sm:$0xf]
        %v292 = vld [vmem:[%s243 + $0xc] sm:$0xf]
        %v293 = vld [vmem:[%s243 + $0x10] sm:$0xf]
        %v294 = vld [vmem:[%s243 + $0x14] sm:$0xf]
        %v295 = vld [vmem:[%s243 + $0x18] sm:$0xf]
        %v296 = vld [vmem:[%s243 + $0x1c] sm:$0xf]
        %v297 = vld [vmem:[%s243 + $0x20] sm:$0xf]
        %v298 = vld [vmem:[%s243 + $0x24] sm:$0xf]
        %v299 = vld [vmem:[%s243 + $0x28] sm:$0xf]
        %v300 = vld [vmem:[%s243 + $0x2c] sm:$0xf]
        %v301 = vld [vmem:[%s243 + $0x30] sm:$0xf]
        %v302 = vld [vmem:[%s243 + $0x34] sm:$0xf]
        %v303 = vld [vmem:[%s243 + $0x38] sm:$0xf]
        %v304 = vld [vmem:[%s243 + $0x3c] sm:$0xf]
        %v305 = vld [vmem:[%s2] sm:$0xf]
        %v306 = vld [vmem:[%s2 + $0x4] sm:$0xf]
        %v307 = vld [vmem:[%s2 + $0x8] sm:$0xf]
        %v308 = vld [vmem:[%s2 + $0xc] sm:$0xf]
        %v325 = vunpack.c.l.b16 %v289
        %v326 = vunpack.c.l.b16 %v290
        %v327 = vunpack.c.l.b16 %v291
        %v328 = vunpack.c.l.b16 %v292
        %v329 = vunpack.c.l.b16 %v293
        %v330 = vunpack.c.l.b16 %v294
        %v331 = vunpack.c.l.b16 %v295
        %v332 = vunpack.c.l.b16 %v296
        %v333 = vunpack.c.l.b16 %v297
        %v334 = vunpack.c.l.b16 %v298
        %v335 = vunpack.c.l.b16 %v299
        %v336 = vunpack.c.l.b16 %v300
        %v337 = vunpack.c.l.b16 %v301
        %v338 = vunpack.c.l.b16 %v302
        %v339 = vunpack.c.l.b16 %v303
        %v340 = vunpack.c.l.b16 %v304
        %v341 = vpack.c.b16 %v326, %v325
        %v342 = vpack.c.b16 %v328, %v327
        %v343 = vpack.c.b16 %v330, %v329
        %v344 = vpack.c.b16 %v332, %v331
        %v345 = vpack.c.b16 %v334, %v333
        %v346 = vpack.c.b16 %v336, %v335
        %v347 = vpack.c.b16 %v338, %v337
        %v348 = vpack.c.b16 %v340, %v339
        %v353 = vunpack.c.l.b16 %v305
        %v354 = vunpack.c.l.b16 %v306
        %v355 = vunpack.c.l.b16 %v307
        %v356 = vunpack.c.l.b16 %v308
        %v357 = vpack.c.b16 %v354, %v353
        %v358 = vpack.c.b16 %v356, %v355
        %vm361 = vcmask 261120
        %v363 = vsel %vm361, %v341, 0
        %v366 = vsel %vm361, %v342, 0
        %v369 = vsel %vm361, %v343, 0
        %v372 = vsel %vm361, %v344, 0
        %v375 = vsel %vm361, %v345, 0
        %v378 = vsel %vm361, %v346, 0
        %v381 = vsel %vm361, %v347, 0
        %v384 = vsel %vm361, %v348, 0
        %386 = vmatpush.bf16.msra.mxu0 0
        %387 = vmatpush.bf16.msra.mxu0 0
        %388 = vmatpush.bf16.msra.mxu0 0
        %389 = vmatpush.bf16.msra.mxu0 0
        %390 = vmatpush.bf16.msra.mxu0 0
        %391 = vmatpush.bf16.msra.mxu0 0
        %392 = vmatpush.bf16.msra.mxu0 %v358
        %393 = vmatpush.bf16.msra.mxu0 %v357
        %394 = vmatmul.bf16.gmra.mxu0 %v363
        %v395 = vpop.f32.mrf.mxu0
        %v396 = vadd.f32 0.0, %v395
        %v397 = vpop.f32.mrf.mxu0
        %v398 = vadd.f32 0.0, %v397
        %399 = vmatmul.bf16.gmra.mxu0 %v366
        %v400 = vpop.f32.mrf.mxu0
        %v401 = vadd.f32 0.0, %v400
        %v402 = vpop.f32.mrf.mxu0
        %v403 = vadd.f32 0.0, %v402
        %404 = vmatmul.bf16.gmra.mxu0 %v369
        %v405 = vpop.f32.mrf.mxu0
        %v406 = vadd.f32 0.0, %v405
        %v407 = vpop.f32.mrf.mxu0
        %v408 = vadd.f32 0.0, %v407
        %409 = vmatmul.bf16.gmra.mxu0 %v372
        %v410 = vpop.f32.mrf.mxu0
        %v411 = vadd.f32 0.0, %v410
        %v412 = vpop.f32.mrf.mxu0
        %v413 = vadd.f32 0.0, %v412
        %414 = vmatmul.bf16.gmra.mxu0 %v375
        %v415 = vpop.f32.mrf.mxu0
        %v416 = vadd.f32 0.0, %v415
        %v417 = vpop.f32.mrf.mxu0
        %v418 = vadd.f32 0.0, %v417
        %419 = vmatmul.bf16.gmra.mxu0 %v378
        %v420 = vpop.f32.mrf.mxu0
        %v421 = vadd.f32 0.0, %v420
        %v422 = vpop.f32.mrf.mxu0
        %v423 = vadd.f32 0.0, %v422
        %424 = vmatmul.bf16.gmra.mxu0 %v381
        %v425 = vpop.f32.mrf.mxu0
        %v426 = vadd.f32 0.0, %v425
        %v427 = vpop.f32.mrf.mxu0
        %v428 = vadd.f32 0.0, %v427
        %429 = vmatmul.bf16.gmra.mxu0 %v384
        %v430 = vpop.f32.mrf.mxu0
        %v431 = vadd.f32 0.0, %v430
        %v432 = vpop.f32.mrf.mxu0
        %v433 = vadd.f32 0.0, %v432
        %434 = vdwg.mxu0
        %v435 = vld [vmem:[%s280] sm:$0xff]
        %v436 = vld [vmem:[%s3] sm:$0x1]
        %v438 = vperm.slane %v436, 0
        %v440 = vadd.f32 %v396, %v438
        %v441 = vadd.f32 %v398, %v438
        %v442 = vadd.f32 %v401, %v438
        %v443 = vadd.f32 %v403, %v438
        %v444 = vadd.f32 %v406, %v438
        %v445 = vadd.f32 %v408, %v438
        %v446 = vadd.f32 %v411, %v438
        %v447 = vadd.f32 %v413, %v438
        %v448 = vadd.f32 %v416, %v438
        %v449 = vadd.f32 %v418, %v438
        %v450 = vadd.f32 %v421, %v438
        %v451 = vadd.f32 %v423, %v438
        %v452 = vadd.f32 %v426, %v438
        %v453 = vadd.f32 %v428, %v438
        %v454 = vadd.f32 %v431, %v438
        %v455 = vadd.f32 %v433, %v438
        %v456 = vxor.u32 %v440, 2147483648
        %v457 = vxor.u32 %v441, 2147483648
        %v458 = vxor.u32 %v442, 2147483648
        %v459 = vxor.u32 %v443, 2147483648
        %v460 = vxor.u32 %v444, 2147483648
        %v461 = vxor.u32 %v445, 2147483648
        %v462 = vxor.u32 %v446, 2147483648
        %v463 = vxor.u32 %v447, 2147483648
        %v464 = vxor.u32 %v448, 2147483648
        %v465 = vxor.u32 %v449, 2147483648
        %v466 = vxor.u32 %v450, 2147483648
        %v467 = vxor.u32 %v451, 2147483648
        %v468 = vxor.u32 %v452, 2147483648
        %v469 = vxor.u32 %v453, 2147483648
        %v470 = vxor.u32 %v454, 2147483648
        %v471 = vxor.u32 %v455, 2147483648
        %v472 = vmul.f32 %v456, 1.442695
        %v473 = vpow.pop %v472
        %v474 = vmul.f32 %v457, 1.442695
        %v475 = vpow.pop %v474
        %v476 = vmul.f32 %v458, 1.442695
        %v477 = vpow.pop %v476
        %v478 = vmul.f32 %v459, 1.442695
        %v479 = vpow.pop %v478
        %v480 = vmul.f32 %v460, 1.442695
        %v481 = vpow.pop %v480
        %v482 = vmul.f32 %v461, 1.442695
        %v483 = vpow.pop %v482
        %v484 = vmul.f32 %v462, 1.442695
        %v485 = vpow.pop %v484
        %v486 = vmul.f32 %v463, 1.442695
        %v487 = vpow.pop %v486
        %v488 = vmul.f32 %v464, 1.442695
        %v489 = vpow.pop %v488
        %v490 = vmul.f32 %v465, 1.442695
        %v491 = vpow.pop %v490
        %v492 = vmul.f32 %v466, 1.442695
        %v493 = vpow.pop %v492
        %v494 = vmul.f32 %v467, 1.442695
        %v495 = vpow.pop %v494
        %v496 = vmul.f32 %v468, 1.442695
        %v497 = vpow.pop %v496
        %v498 = vmul.f32 %v469, 1.442695
        %v499 = vpow.pop %v498
        %v500 = vmul.f32 %v470, 1.442695
        %v501 = vpow.pop %v500
        %v502 = vmul.f32 %v471, 1.442695
        %v503 = vpow.pop %v502
        %v504 = vadd.f32 %v473, 1.0
        %v505 = vadd.f32 %v475, 1.0
        %v506 = vadd.f32 %v477, 1.0
        %v507 = vadd.f32 %v479, 1.0
        %v508 = vadd.f32 %v481, 1.0
        %v509 = vadd.f32 %v483, 1.0
        %v510 = vadd.f32 %v485, 1.0
        %v511 = vadd.f32 %v487, 1.0
        %v512 = vadd.f32 %v489, 1.0
        %v513 = vadd.f32 %v491, 1.0
        %v514 = vadd.f32 %v493, 1.0
        %v515 = vadd.f32 %v495, 1.0
        %v516 = vadd.f32 %v497, 1.0
        %v517 = vadd.f32 %v499, 1.0
        %v518 = vadd.f32 %v501, 1.0
        %v519 = vadd.f32 %v503, 1.0
        %v520 = vrcp.pop %v504
        %v521 = vmul.f32 %v504, %v520
        %v522 = vsub.f32 1.0, %v521
        %v523 = vmul.f32 %v520, %v522
        %v524 = vadd.f32 %v520, %v523
        %vm525 = vweird.f32 %v504
        %vm526 = vweird.f32 %v520
        %vm527 = vmor %vm525, %vm526
        %v528 = vsel %vm527, %v520, %v524
        %v529 = vand.u32 2147483647, %v504
        %vm530 = vcmp.eq.f32.partialorder %v529, 8.507059e+37
        %v531 = vand.u32 %v504, 2147483648
        %v532 = vor.u32 1.1754944e-38, %v531
        %v533 = vsel %vm530, %v532, %v528
        %v534 = vmul.f32 1.0, %v533
        %v535 = vrcp.pop %v505
        %v536 = vmul.f32 %v505, %v535
        %v537 = vsub.f32 1.0, %v536
        %v538 = vmul.f32 %v535, %v537
        %v539 = vadd.f32 %v535, %v538
        %vm540 = vweird.f32 %v505
        %vm541 = vweird.f32 %v535
        %vm542 = vmor %vm540, %vm541
        %v543 = vsel %vm542, %v535, %v539
        %v544 = vand.u32 2147483647, %v505
        %vm545 = vcmp.eq.f32.partialorder %v544, 8.507059e+37
        %v546 = vand.u32 %v505, 2147483648
        %v547 = vor.u32 1.1754944e-38, %v546
        %v548 = vsel %vm545, %v547, %v543
        %v549 = vmul.f32 1.0, %v548
        %v550 = vrcp.pop %v506
        %v551 = vmul.f32 %v506, %v550
        %v552 = vsub.f32 1.0, %v551
        %v553 = vmul.f32 %v550, %v552
        %v554 = vadd.f32 %v550, %v553
        %vm555 = vweird.f32 %v506
        %vm556 = vweird.f32 %v550
        %vm557 = vmor %vm555, %vm556
        %v558 = vsel %vm557, %v550, %v554
        %v559 = vand.u32 2147483647, %v506
        %vm560 = vcmp.eq.f32.partialorder %v559, 8.507059e+37
        %v561 = vand.u32 %v506, 2147483648
        %v562 = vor.u32 1.1754944e-38, %v561
        %v563 = vsel %vm560, %v562, %v558
        %v564 = vmul.f32 1.0, %v563
        %v565 = vrcp.pop %v507
        %v566 = vmul.f32 %v507, %v565
        %v567 = vsub.f32 1.0, %v566
        %v568 = vmul.f32 %v565, %v567
        %v569 = vadd.f32 %v565, %v568
        %vm570 = vweird.f32 %v507
        %vm571 = vweird.f32 %v565
        %vm572 = vmor %vm570, %vm571
        %v573 = vsel %vm572, %v565, %v569
        %v574 = vand.u32 2147483647, %v507
        %vm575 = vcmp.eq.f32.partialorder %v574, 8.507059e+37
        %v576 = vand.u32 %v507, 2147483648
        %v577 = vor.u32 1.1754944e-38, %v576
        %v578 = vsel %vm575, %v577, %v573
        %v579 = vmul.f32 1.0, %v578
        %v580 = vrcp.pop %v508
        %v581 = vmul.f32 %v508, %v580
        %v582 = vsub.f32 1.0, %v581
        %v583 = vmul.f32 %v580, %v582
        %v584 = vadd.f32 %v580, %v583
        %vm585 = vweird.f32 %v508
        %vm586 = vweird.f32 %v580
        %vm587 = vmor %vm585, %vm586
        %v588 = vsel %vm587, %v580, %v584
        %v589 = vand.u32 2147483647, %v508
        %vm590 = vcmp.eq.f32.partialorder %v589, 8.507059e+37
        %v591 = vand.u32 %v508, 2147483648
        %v592 = vor.u32 1.1754944e-38, %v591
        %v593 = vsel %vm590, %v592, %v588
        %v594 = vmul.f32 1.0, %v593
        %v595 = vrcp.pop %v509
        %v596 = vmul.f32 %v509, %v595
        %v597 = vsub.f32 1.0, %v596
        %v598 = vmul.f32 %v595, %v597
        %v599 = vadd.f32 %v595, %v598
        %vm600 = vweird.f32 %v509
        %vm601 = vweird.f32 %v595
        %vm602 = vmor %vm600, %vm601
        %v603 = vsel %vm602, %v595, %v599
        %v604 = vand.u32 2147483647, %v509
        %vm605 = vcmp.eq.f32.partialorder %v604, 8.507059e+37
        %v606 = vand.u32 %v509, 2147483648
        %v607 = vor.u32 1.1754944e-38, %v606
        %v608 = vsel %vm605, %v607, %v603
        %v609 = vmul.f32 1.0, %v608
        %v610 = vrcp.pop %v510
        %v611 = vmul.f32 %v510, %v610
        %v612 = vsub.f32 1.0, %v611
        %v613 = vmul.f32 %v610, %v612
        %v614 = vadd.f32 %v610, %v613
        %vm615 = vweird.f32 %v510
        %vm616 = vweird.f32 %v610
        %vm617 = vmor %vm615, %vm616
        %v618 = vsel %vm617, %v610, %v614
        %v619 = vand.u32 2147483647, %v510
        %vm620 = vcmp.eq.f32.partialorder %v619, 8.507059e+37
        %v621 = vand.u32 %v510, 2147483648
        %v622 = vor.u32 1.1754944e-38, %v621
        %v623 = vsel %vm620, %v622, %v618
        %v624 = vmul.f32 1.0, %v623
        %v625 = vrcp.pop %v511
        %v626 = vmul.f32 %v511, %v625
        %v627 = vsub.f32 1.0, %v626
        %v628 = vmul.f32 %v625, %v627
        %v629 = vadd.f32 %v625, %v628
        %vm630 = vweird.f32 %v511
        %vm631 = vweird.f32 %v625
        %vm632 = vmor %vm630, %vm631
        %v633 = vsel %vm632, %v625, %v629
        %v634 = vand.u32 2147483647, %v511
        %vm635 = vcmp.eq.f32.partialorder %v634, 8.507059e+37
        %v636 = vand.u32 %v511, 2147483648
        %v637 = vor.u32 1.1754944e-38, %v636
        %v638 = vsel %vm635, %v637, %v633
        %v639 = vmul.f32 1.0, %v638
        %v640 = vrcp.pop %v512
        %v641 = vmul.f32 %v512, %v640
        %v642 = vsub.f32 1.0, %v641
        %v643 = vmul.f32 %v640, %v642
        %v644 = vadd.f32 %v640, %v643
        %vm645 = vweird.f32 %v512
        %vm646 = vweird.f32 %v640
        %vm647 = vmor %vm645, %vm646
        %v648 = vsel %vm647, %v640, %v644
        %v649 = vand.u32 2147483647, %v512
        %vm650 = vcmp.eq.f32.partialorder %v649, 8.507059e+37
        %v651 = vand.u32 %v512, 2147483648
        %v652 = vor.u32 1.1754944e-38, %v651
        %v653 = vsel %vm650, %v652, %v648
        %v654 = vmul.f32 1.0, %v653
        %v655 = vrcp.pop %v513
        %v656 = vmul.f32 %v513, %v655
        %v657 = vsub.f32 1.0, %v656
        %v658 = vmul.f32 %v655, %v657
        %v659 = vadd.f32 %v655, %v658
        %vm660 = vweird.f32 %v513
        %vm661 = vweird.f32 %v655
        %vm662 = vmor %vm660, %vm661
        %v663 = vsel %vm662, %v655, %v659
        %v664 = vand.u32 2147483647, %v513
        %vm665 = vcmp.eq.f32.partialorder %v664, 8.507059e+37
        %v666 = vand.u32 %v513, 2147483648
        %v667 = vor.u32 1.1754944e-38, %v666
        %v668 = vsel %vm665, %v667, %v663
        %v669 = vmul.f32 1.0, %v668
        %v670 = vrcp.pop %v514
        %v671 = vmul.f32 %v514, %v670
        %v672 = vsub.f32 1.0, %v671
        %v673 = vmul.f32 %v670, %v672
        %v674 = vadd.f32 %v670, %v673
        %vm675 = vweird.f32 %v514
        %vm676 = vweird.f32 %v670
        %vm677 = vmor %vm675, %vm676
        %v678 = vsel %vm677, %v670, %v674
        %v679 = vand.u32 2147483647, %v514
        %vm680 = vcmp.eq.f32.partialorder %v679, 8.507059e+37
        %v681 = vand.u32 %v514, 2147483648
        %v682 = vor.u32 1.1754944e-38, %v681
        %v683 = vsel %vm680, %v682, %v678
        %v684 = vmul.f32 1.0, %v683
        %v685 = vrcp.pop %v515
        %v686 = vmul.f32 %v515, %v685
        %v687 = vsub.f32 1.0, %v686
        %v688 = vmul.f32 %v685, %v687
        %v689 = vadd.f32 %v685, %v688
        %vm690 = vweird.f32 %v515
        %vm691 = vweird.f32 %v685
        %vm692 = vmor %vm690, %vm691
        %v693 = vsel %vm692, %v685, %v689
        %v694 = vand.u32 2147483647, %v515
        %vm695 = vcmp.eq.f32.partialorder %v694, 8.507059e+37
        %v696 = vand.u32 %v515, 2147483648
        %v697 = vor.u32 1.1754944e-38, %v696
        %v698 = vsel %vm695, %v697, %v693
        %v699 = vmul.f32 1.0, %v698
        %v700 = vrcp.pop %v516
        %v701 = vmul.f32 %v516, %v700
        %v702 = vsub.f32 1.0, %v701
        %v703 = vmul.f32 %v700, %v702
        %v704 = vadd.f32 %v700, %v703
        %vm705 = vweird.f32 %v516
        %vm706 = vweird.f32 %v700
        %vm707 = vmor %vm705, %vm706
        %v708 = vsel %vm707, %v700, %v704
        %v709 = vand.u32 2147483647, %v516
        %vm710 = vcmp.eq.f32.partialorder %v709, 8.507059e+37
        %v711 = vand.u32 %v516, 2147483648
        %v712 = vor.u32 1.1754944e-38, %v711
        %v713 = vsel %vm710, %v712, %v708
        %v714 = vmul.f32 1.0, %v713
        %v715 = vrcp.pop %v517
        %v716 = vmul.f32 %v517, %v715
        %v717 = vsub.f32 1.0, %v716
        %v718 = vmul.f32 %v715, %v717
        %v719 = vadd.f32 %v715, %v718
        %vm720 = vweird.f32 %v517
        %vm721 = vweird.f32 %v715
        %vm722 = vmor %vm720, %vm721
        %v723 = vsel %vm722, %v715, %v719
        %v724 = vand.u32 2147483647, %v517
        %vm725 = vcmp.eq.f32.partialorder %v724, 8.507059e+37
        %v726 = vand.u32 %v517, 2147483648
        %v727 = vor.u32 1.1754944e-38, %v726
        %v728 = vsel %vm725, %v727, %v723
        %v729 = vmul.f32 1.0, %v728
        %v730 = vrcp.pop %v518
        %v731 = vmul.f32 %v518, %v730
        %v732 = vsub.f32 1.0, %v731
        %v733 = vmul.f32 %v730, %v732
        %v734 = vadd.f32 %v730, %v733
        %vm735 = vweird.f32 %v518
        %vm736 = vweird.f32 %v730
        %vm737 = vmor %vm735, %vm736
        %v738 = vsel %vm737, %v730, %v734
        %v739 = vand.u32 2147483647, %v518
        %vm740 = vcmp.eq.f32.partialorder %v739, 8.507059e+37
        %v741 = vand.u32 %v518, 2147483648
        %v742 = vor.u32 1.1754944e-38, %v741
        %v743 = vsel %vm740, %v742, %v738
        %v744 = vmul.f32 1.0, %v743
        %v745 = vrcp.pop %v519
        %v746 = vmul.f32 %v519, %v745
        %v747 = vsub.f32 1.0, %v746
        %v748 = vmul.f32 %v745, %v747
        %v749 = vadd.f32 %v745, %v748
        %vm750 = vweird.f32 %v519
        %vm751 = vweird.f32 %v745
        %vm752 = vmor %vm750, %vm751
        %v753 = vsel %vm752, %v745, %v749
        %v754 = vand.u32 2147483647, %v519
        %vm755 = vcmp.eq.f32.partialorder %v754, 8.507059e+37
        %v756 = vand.u32 %v519, 2147483648
        %v757 = vor.u32 1.1754944e-38, %v756
        %v758 = vsel %vm755, %v757, %v753
        %v759 = vmul.f32 1.0, %v758
        %v760 = vlaneseq
        %v761 = vshrl.u32 %v760, 7
        %v762 = vadd.s32 %v761, 8
        %s763 = smul.u32 %s27, 16
        %v764 = vstv %s763
        %v765 = vadd.s32 %v761, %v764
        %v766 = vadd.s32 %v762, %v764
        %v767 = vcvt.s32.f32 %v765
        %v768 = vcvt.s32.f32 %v766
        %v770 = vrot.slane %v435, 1
        %v771 = vrot.slane %v435, 2
        %v772 = vrot.slane %v435, 3
        %v773 = vrot.slane %v435, 4
        %v774 = vrot.slane %v435, 5
        %v775 = vrot.slane %v435, 6
        %v776 = vrot.slane %v435, 7
        %v777 = vperm.slane %v435, 0
        %v778 = vperm.slane %v770, 0
        %v779 = vperm.slane %v771, 0
        %v780 = vperm.slane %v772, 0
        %v781 = vperm.slane %v773, 0
        %v782 = vperm.slane %v774, 0
        %v783 = vperm.slane %v775, 0
        %v784 = vperm.slane %v776, 0
        %vm793 = vcmp.lt.f32.partialorder %v767, %v777
        %vm794 = vcmp.lt.f32.partialorder %v768, %v777
        %vm795 = vcmp.lt.f32.partialorder %v767, %v778
        %vm796 = vcmp.lt.f32.partialorder %v768, %v778
        %vm797 = vcmp.lt.f32.partialorder %v767, %v779
        %vm798 = vcmp.lt.f32.partialorder %v768, %v779
        %vm799 = vcmp.lt.f32.partialorder %v767, %v780
        %vm800 = vcmp.lt.f32.partialorder %v768, %v780
        %vm801 = vcmp.lt.f32.partialorder %v767, %v781
        %vm802 = vcmp.lt.f32.partialorder %v768, %v781
        %vm803 = vcmp.lt.f32.partialorder %v767, %v782
        %vm804 = vcmp.lt.f32.partialorder %v768, %v782
        %vm805 = vcmp.lt.f32.partialorder %v767, %v783
        %vm806 = vcmp.lt.f32.partialorder %v768, %v783
        %vm807 = vcmp.lt.f32.partialorder %v767, %v784
        %vm808 = vcmp.lt.f32.partialorder %v768, %v784
        %825 = vrot.lane.b32.xlu0 %v534, 1
        %v826 = vpop.permute.xlu0 %825
        %827 = vrot.lane.b32.xlu0 %v549, 1
        %v828 = vpop.permute.xlu0 %827
        %829 = vrot.lane.b32.xlu0 %v564, 1
        %v830 = vpop.permute.xlu0 %829
        %831 = vrot.lane.b32.xlu0 %v579, 1
        %v832 = vpop.permute.xlu0 %831
        %833 = vrot.lane.b32.xlu0 %v594, 1
        %v834 = vpop.permute.xlu0 %833
        %835 = vrot.lane.b32.xlu0 %v609, 1
        %v836 = vpop.permute.xlu0 %835
        %837 = vrot.lane.b32.xlu0 %v624, 1
        %v838 = vpop.permute.xlu0 %837
        %839 = vrot.lane.b32.xlu0 %v639, 1
        %v840 = vpop.permute.xlu0 %839
        %841 = vrot.lane.b32.xlu0 %v654, 1
        %v842 = vpop.permute.xlu0 %841
        %843 = vrot.lane.b32.xlu0 %v669, 1
        %v844 = vpop.permute.xlu0 %843
        %845 = vrot.lane.b32.xlu0 %v684, 1
        %v846 = vpop.permute.xlu0 %845
        %847 = vrot.lane.b32.xlu0 %v699, 1
        %v848 = vpop.permute.xlu0 %847
        %849 = vrot.lane.b32.xlu0 %v714, 1
        %v850 = vpop.permute.xlu0 %849
        %851 = vrot.lane.b32.xlu0 %v729, 1
        %v852 = vpop.permute.xlu0 %851
        %853 = vrot.lane.b32.xlu0 %v744, 1
        %v854 = vpop.permute.xlu0 %853
        %855 = vrot.lane.b32.xlu0 %v759, 1
        %v856 = vpop.permute.xlu0 %855
        %v873 = vsel %vm793, %v826, 0.0
        %v874 = vsel %vm794, %v828, 0.0
        %v875 = vsel %vm795, %v830, 0.0
        %v876 = vsel %vm796, %v832, 0.0
        %v877 = vsel %vm797, %v834, 0.0
        %v878 = vsel %vm798, %v836, 0.0
        %v879 = vsel %vm799, %v838, 0.0
        %v880 = vsel %vm800, %v840, 0.0
        %v881 = vsel %vm801, %v842, 0.0
        %v882 = vsel %vm802, %v844, 0.0
        %v883 = vsel %vm803, %v846, 0.0
        %v884 = vsel %vm804, %v848, 0.0
        %v885 = vsel %vm805, %v850, 0.0
        %v886 = vsel %vm806, %v852, 0.0
        %v887 = vsel %vm807, %v854, 0.0
        %v888 = vsel %vm808, %v856, 0.0
        %v889 = vld [vmem:[#allocation2] sm:$0xff]
        %891 = vset.pattern.permute.xlu0 0
        %892 = vperm.xlu0 %891, %v873
        %v893 = vpop.permute.xlu0 %892
        %896 = vset.pattern.permute.xlu0 0
        %897 = vperm.xlu0 %896, %v874
        %v898 = vpop.permute.xlu0 %897
        %901 = vset.pattern.permute.xlu0 0
        %902 = vperm.xlu0 %901, %v875
        %v903 = vpop.permute.xlu0 %902
        %906 = vset.pattern.permute.xlu0 0
        %907 = vperm.xlu0 %906, %v876
        %v908 = vpop.permute.xlu0 %907
        %911 = vset.pattern.permute.xlu0 0
        %912 = vperm.xlu0 %911, %v877
        %v913 = vpop.permute.xlu0 %912
        %916 = vset.pattern.permute.xlu0 0
        %917 = vperm.xlu0 %916, %v878
        %v918 = vpop.permute.xlu0 %917
        %921 = vset.pattern.permute.xlu0 0
        %922 = vperm.xlu0 %921, %v879
        %v923 = vpop.permute.xlu0 %922
        %926 = vset.pattern.permute.xlu0 0
        %927 = vperm.xlu0 %926, %v880
        %v928 = vpop.permute.xlu0 %927
        %931 = vset.pattern.permute.xlu0 0
        %932 = vperm.xlu0 %931, %v881
        %v933 = vpop.permute.xlu0 %932
        %936 = vset.pattern.permute.xlu0 0
        %937 = vperm.xlu0 %936, %v882
        %v938 = vpop.permute.xlu0 %937
        %941 = vset.pattern.permute.xlu0 0
        %942 = vperm.xlu0 %941, %v883
        %v943 = vpop.permute.xlu0 %942
        %946 = vset.pattern.permute.xlu0 0
        %947 = vperm.xlu0 %946, %v884
        %v948 = vpop.permute.xlu0 %947
        %951 = vset.pattern.permute.xlu0 0
        %952 = vperm.xlu0 %951, %v885
        %v953 = vpop.permute.xlu0 %952
        %956 = vset.pattern.permute.xlu0 0
        %957 = vperm.xlu0 %956, %v886
        %v958 = vpop.permute.xlu0 %957
        %961 = vset.pattern.permute.xlu0 0
        %962 = vperm.xlu0 %961, %v887
        %v963 = vpop.permute.xlu0 %962
        %966 = vset.pattern.permute.xlu0 0
        %967 = vperm.xlu0 %966, %v888
        %v968 = vpop.permute.xlu0 %967
        %v970 = vmul.f32 %v893, %v396
        %v971 = vmul.f32 %v898, %v398
        %v972 = vmul.f32 %v903, %v401
        %v973 = vmul.f32 %v908, %v403
        %v974 = vmul.f32 %v913, %v406
        %v975 = vmul.f32 %v918, %v408
        %v976 = vmul.f32 %v923, %v411
        %v977 = vmul.f32 %v928, %v413
        %v978 = vmul.f32 %v933, %v416
        %v979 = vmul.f32 %v938, %v418
        %v980 = vmul.f32 %v943, %v421
        %v981 = vmul.f32 %v948, %v423
        %v982 = vmul.f32 %v953, %v426
        %v983 = vmul.f32 %v958, %v428
        %v984 = vmul.f32 %v963, %v431
        %v985 = vmul.f32 %v968, %v433
        %v986 = vadd.f32 %v970, %v971
        %v987 = vrot.slane %v986, 4
        %v988 = vadd.f32 %v986, %v987
        %v989 = vrot.slane %v988, 2
        %v990 = vadd.f32 %v988, %v989
        %v991 = vrot.slane %v990, 1
        %v992 = vadd.f32 %v990, %v991
        %v993 = vadd.f32 %v972, %v973
        %v994 = vrot.slane %v993, 4
        %v995 = vadd.f32 %v993, %v994
        %v996 = vrot.slane %v995, 2
        %v997 = vadd.f32 %v995, %v996
        %v998 = vrot.slane %v997, 1
        %v999 = vadd.f32 %v997, %v998
        %v1000 = vadd.f32 %v974, %v975
        %v1001 = vrot.slane %v1000, 4
        %v1002 = vadd.f32 %v1000, %v1001
        %v1003 = vrot.slane %v1002, 2
        %v1004 = vadd.f32 %v1002, %v1003
        %v1005 = vrot.slane %v1004, 1
        %v1006 = vadd.f32 %v1004, %v1005
        %v1007 = vadd.f32 %v976, %v977
        %v1008 = vrot.slane %v1007, 4
        %v1009 = vadd.f32 %v1007, %v1008
        %v1010 = vrot.slane %v1009, 2
        %v1011 = vadd.f32 %v1009, %v1010
        %v1012 = vrot.slane %v1011, 1
        %v1013 = vadd.f32 %v1011, %v1012
        %v1014 = vadd.f32 %v978, %v979
        %v1015 = vrot.slane %v1014, 4
        %v1016 = vadd.f32 %v1014, %v1015
        %v1017 = vrot.slane %v1016, 2
        %v1018 = vadd.f32 %v1016, %v1017
        %v1019 = vrot.slane %v1018, 1
        %v1020 = vadd.f32 %v1018, %v1019
        %v1021 = vadd.f32 %v980, %v981
        %v1022 = vrot.slane %v1021, 4
        %v1023 = vadd.f32 %v1021, %v1022
        %v1024 = vrot.slane %v1023, 2
        %v1025 = vadd.f32 %v1023, %v1024
        %v1026 = vrot.slane %v1025, 1
        %v1027 = vadd.f32 %v1025, %v1026
        %v1028 = vadd.f32 %v982, %v983
        %v1029 = vrot.slane %v1028, 4
        %v1030 = vadd.f32 %v1028, %v1029
        %v1031 = vrot.slane %v1030, 2
        %v1032 = vadd.f32 %v1030, %v1031
        %v1033 = vrot.slane %v1032, 1
        %v1034 = vadd.f32 %v1032, %v1033
        %v1035 = vadd.f32 %v984, %v985
        %v1036 = vrot.slane %v1035, 4
        %v1037 = vadd.f32 %v1035, %v1036
        %v1038 = vrot.slane %v1037, 2
        %v1039 = vadd.f32 %v1037, %v1038
        %v1040 = vrot.slane %v1039, 1
        %v1041 = vadd.f32 %v1039, %v1040
        %vm1050 = vcmask 1041409
        %v1051 = vsel %vm1050, %v999, %v992
        %vm1052 = vcmask 1042434
        %v1053 = vsel %vm1052, %v1006, %v1051
        %vm1054 = vcmask 1043459
        %v1055 = vsel %vm1054, %v1013, %v1053
        %vm1056 = vcmask 1044484
        %v1057 = vsel %vm1056, %v1020, %v1055
        %vm1058 = vcmask 1045509
        %v1059 = vsel %vm1058, %v1027, %v1057
        %vm1060 = vcmask 1046534
        %v1061 = vsel %vm1060, %v1034, %v1059
        %vm1062 = vcmask 1047559
        %v1063 = vsel %vm1062, %v1041, %v1061
        %v1065 = vadd.f32 %v889, %v1063
        %1066 = vst [vmem:[#allocation2] sm:$0xff] %v1065
        %v1067 = vld [vmem:[#allocation3] sm:$0xff]
        %vm1068 = vcmask 7168
        %v1069 = vsel %vm1068, %v873, 0.0
        %v1070 = vsel %vm1068, %v874, 0.0
        %v1071 = vadd.f32 %v1069, %v1070
        %v1072 = vrot.slane %v1071, 4
        %v1073 = vadd.f32 %v1071, %v1072
        %v1074 = vrot.slane %v1073, 2
        %v1075 = vadd.f32 %v1073, %v1074
        %v1076 = vrot.slane %v1075, 1
        %v1077 = vadd.f32 %v1075, %v1076
        %v1078 = vsel %vm1068, %v875, 0.0
        %v1079 = vsel %vm1068, %v876, 0.0
        %v1080 = vadd.f32 %v1078, %v1079
        %v1081 = vrot.slane %v1080, 4
        %v1082 = vadd.f32 %v1080, %v1081
        %v1083 = vrot.slane %v1082, 2
        %v1084 = vadd.f32 %v1082, %v1083
        %v1085 = vrot.slane %v1084, 1
        %v1086 = vadd.f32 %v1084, %v1085
        %v1087 = vsel %vm1068, %v877, 0.0
        %v1088 = vsel %vm1068, %v878, 0.0
        %v1089 = vadd.f32 %v1087, %v1088
        %v1090 = vrot.slane %v1089, 4
        %v1091 = vadd.f32 %v1089, %v1090
        %v1092 = vrot.slane %v1091, 2
        %v1093 = vadd.f32 %v1091, %v1092
        %v1094 = vrot.slane %v1093, 1
        %v1095 = vadd.f32 %v1093, %v1094
        %v1096 = vsel %vm1068, %v879, 0.0
        %v1097 = vsel %vm1068, %v880, 0.0
        %v1098 = vadd.f32 %v1096, %v1097
        %v1099 = vrot.slane %v1098, 4
        %v1100 = vadd.f32 %v1098, %v1099
        %v1101 = vrot.slane %v1100, 2
        %v1102 = vadd.f32 %v1100, %v1101
        %v1103 = vrot.slane %v1102, 1
        %v1104 = vadd.f32 %v1102, %v1103
        %v1105 = vsel %vm1068, %v881, 0.0
        %v1106 = vsel %vm1068, %v882, 0.0
        %v1107 = vadd.f32 %v1105, %v1106
        %v1108 = vrot.slane %v1107, 4
        %v1109 = vadd.f32 %v1107, %v1108
        %v1110 = vrot.slane %v1109, 2
        %v1111 = vadd.f32 %v1109, %v1110
        %v1112 = vrot.slane %v1111, 1
        %v1113 = vadd.f32 %v1111, %v1112
        %v1114 = vsel %vm1068, %v883, 0.0
        %v1115 = vsel %vm1068, %v884, 0.0
        %v1116 = vadd.f32 %v1114, %v1115
        %v1117 = vrot.slane %v1116, 4
        %v1118 = vadd.f32 %v1116, %v1117
        %v1119 = vrot.slane %v1118, 2
        %v1120 = vadd.f32 %v1118, %v1119
        %v1121 = vrot.slane %v1120, 1
        %v1122 = vadd.f32 %v1120, %v1121
        %v1123 = vsel %vm1068, %v885, 0.0
        %v1124 = vsel %vm1068, %v886, 0.0
        %v1125 = vadd.f32 %v1123, %v1124
        %v1126 = vrot.slane %v1125, 4
        %v1127 = vadd.f32 %v1125, %v1126
        %v1128 = vrot.slane %v1127, 2
        %v1129 = vadd.f32 %v1127, %v1128
        %v1130 = vrot.slane %v1129, 1
        %v1131 = vadd.f32 %v1129, %v1130
        %v1132 = vsel %vm1068, %v887, 0.0
        %v1133 = vsel %vm1068, %v888, 0.0
        %v1134 = vadd.f32 %v1132, %v1133
        %v1135 = vrot.slane %v1134, 4
        %v1136 = vadd.f32 %v1134, %v1135
        %v1137 = vrot.slane %v1136, 2
        %v1138 = vadd.f32 %v1136, %v1137
        %v1139 = vrot.slane %v1138, 1
        %v1140 = vadd.f32 %v1138, %v1139
        %v1149 = vsel %vm1050, %v1086, %v1077
        %v1150 = vsel %vm1052, %v1095, %v1149
        %v1151 = vsel %vm1054, %v1104, %v1150
        %v1152 = vsel %vm1056, %v1113, %v1151
        %v1153 = vsel %vm1058, %v1122, %v1152
        %v1154 = vsel %vm1060, %v1131, %v1153
        %v1155 = vsel %vm1062, %v1140, %v1154
        %v1157 = vadd.f32 %v1067, %v1155
        %1158 = vst.msk [vmem:[#allocation3] sm:$0xff] %vm1068, %v1157
        // Predicated region
        $region49: #{tpu_custom_call.1} parent=39 // pred_check
          %p1159 = pneg %p282
        $region50: #{tpu_custom_call.1} parent=39 // pred_check_branch
          %1161 = sbr.rel (%p1159) target = $region52
        $region51: #{tpu_custom_call.1} parent=39 // pred_region
          %v1162 = vrcp.pop %v435
          %v1163 = vmul.f32 %v435, %v1162
          %v1164 = vsub.f32 1.0, %v1163
          %v1165 = vmul.f32 %v1162, %v1164
          %v1166 = vadd.f32 %v1162, %v1165
          %vm1167 = vweird.f32 %v435
          %vm1168 = vweird.f32 %v1162
          %vm1169 = vmor %vm1167, %vm1168
          %v1170 = vsel %vm1169, %v1162, %v1166
          %v1171 = vand.u32 2147483647, %v435
          %vm1172 = vcmp.eq.f32.partialorder %v1171, 8.507059e+37
          %v1173 = vand.u32 %v435, 2147483648
          %v1174 = vor.u32 1.1754944e-38, %v1173
          %v1175 = vsel %vm1172, %v1174, %v1170
          %v1176 = vld [vmem:[#allocation2] sm:$0xff]
          %v1177 = vld [vmem:[%s3] sm:$0x1]
          %v1178 = vld [vmem:[#allocation3] sm:$0xff]
          %v1180 = vperm.slane %v1177, 0
          %1183 = vset.pattern.permute.xlu0 0
          %1184 = vperm.xlu0 %1183, %v1178
          %v1185 = vpop.permute.xlu0 %1184
          %v1187 = vmul.f32 %v1180, %v1185
          %v1188 = vadd.f32 %v1176, %v1187
          %1190 = vset.pattern.permute.xlu0 0
          %1191 = vperm.xlu0 %1190, %v1175
          %v1192 = vpop.permute.xlu0 %1191
          %v1194 = vmul.f32 %v1188, %v1192
          %1195 = vst [vmem:[%s274] sm:$0xff] %v1194
        $region52: #{tpu_custom_call.1} parent=39 // pred_fallthru
          _
        %s1196 = sand.u32 %s159, 1
        %s1197 = scalar_lea.sflag [#allocation6], %s1196
        %s1198 = sand.u32 %s159, 1
        %s1199 = smul.addr %s1198, 8
        %s1200 = scalar_lea.vmem [#allocation7], %s1199
        // Predicated region
        $region53: #{tpu_custom_call.1} parent=39 // pred_check
          %p1201 = pneg %p169
        $region54: #{tpu_custom_call.1} parent=39 // pred_check_branch
          %1203 = sbr.rel (%p1201) target = $region56
        $region55: #{tpu_custom_call.1} parent=39 // pred_region
          %1205 = vsyncadd %s1197, 0
          %s1206 = smul.addr %s26, 8
          %s1207 = scalar_lea.hbm %s5, %s1206
          %s1209 = sshll.u32 %s1200, 4
          %s1210 = int_to_ptr.vmem [resolvable:$true] %s1209
          %s1211 = sshll.u32 %s1207, 4
          %s1212 = int_to_ptr.hbm [resolvable:$true] %s1211
          %1214 = dma.vmem_to_hbm [thread:$0]  %s1210, 128, %s1212, %s1197
        $region56: #{tpu_custom_call.1} parent=39 // pred_fallthru
          _
      $region40: #{tpu_custom_call.1} parent=5 // pred_fallthru
        _
      %p1215 = scmp.le.s32.totalorder 2, %s17
      // Predicated region
      $region57: #{tpu_custom_call.1} parent=5 // pred_check
        %p1216 = pneg %p1215
      $region58: #{tpu_custom_call.1} parent=5 // pred_check_branch
        %1218 = sbr.rel (%p1216) target = $region60
      $region59: #{tpu_custom_call.1} parent=5 // pred_region
        %s1219 = ssub.s32 %s17, 2
        // Predicated region
        $region61: #{tpu_custom_call.1} parent=59 // pred_check
          %p1220 = pneg %p175
        $region62: #{tpu_custom_call.1} parent=59 // pred_check_branch
          %1222 = sbr.rel (%p1220) target = $region64
        $region63: #{tpu_custom_call.1} parent=59 // pred_region
          %s1223 = sand.u32 %s160, 1
          %s1224 = scalar_lea.sflag [#allocation6], %s1223
          %s1225 = sand.u32 %s160, 1
          %s1226 = smul.addr %s1225, 8
          %s1227 = scalar_lea.vmem [#allocation7], %s1226
          %1229 = dma.done %s1224, 128
        $region64: #{tpu_custom_call.1} parent=59 // pred_fallthru
          _
      $region60: #{tpu_custom_call.1} parent=5 // pred_fallthru
        _
    $region6: #{tpu_custom_call.1} parent=1 // loop_footer
      %s21 = sadd.s32 1, %s17
    $region7: #{tpu_custom_call.1} parent=1 // loop_footer_branch
      %16 = sbr.rel target = $region3
    $region8: #{tpu_custom_call.1} parent=1 // loop_exit
      _
    %1230 = vsyncpa [#allocation5], 1
    %s1231 = scalar_lea.sflag [#allocation5], 1
    %1232 = vsyncpa %s1231, 1
    %1233 = vsyncpa [#allocation6], 1
    %s1234 = scalar_lea.sflag [#allocation6], 1
    %1235 = vsyncpa %s1234, 1

</llo_original>
